<compile_context>
chip_gen: v7x
topology: tpu7x:2x2x1
jax: 0.10.0
libtpu: 0.0.40
codegen_flags: <defaults>
</compile_context>

<pallas_src>
import functools

import jax
import jax.numpy as jnp
from jax.experimental import pallas as pl
from jax.experimental.pallas import tpu as pltpu

LANE = 128      # TPU lane width (last dim of a vreg)
SUBLANE = 8     # TPU sublane width (second-to-last dim of a vreg)


def _round_up(x: int, m: int) -> int:
    return ((x + m - 1) // m) * m


def _vmem_footprint_bytes(rows: int, cols: int, itemsize: int = 4) -> int:
    # VMEM layout pads the trailing two dims up to (8, 128) tiles.
    return _round_up(max(rows, 1), SUBLANE) * _round_up(max(cols, 1), LANE) * itemsize


def _batch_tiling(n: int, tile_n: int):
    """Pick (tile_rows, padded_n, num_blocks); tile_rows is a multiple of 8."""
    n_r = _round_up(max(n, 1), SUBLANE)
    tile_n = max(_round_up(tile_n, SUBLANE), SUBLANE)
    if n_r <= tile_n:
        # Small problem: one block covering the whole batch, no pipeline
        # prologue/epilogue, no padded-batch rows.
        return n_r, n_r, 1
    # Otherwise >= 2 blocks (so v7x's two TensorCores both get work under
    # dimension_semantics=("parallel",)), rounded to an even count so there is
    # no straggler tile, each block <= tile_n rows.
    n_blocks = pl.cdiv(n_r, tile_n)
    if n_blocks % 2:
        n_blocks += 1
    tn = _round_up(pl.cdiv(n_r, n_blocks), SUBLANE)
    return tn, tn * n_blocks, n_blocks


def hidden_relu_kernel(x_ref, w1_ref, b1_ref, w2_ref, b2_ref, o_ref):
    # Whole per-row MLP fused in one grid step: matmul -> bias -> ReLU ->
    # matmul -> bias. Feature dims are tiny (Mosaic pads K/N inside vregs),
    # so there are no K/N grid axes; only the batch is tiled.
    x = x_ref[...]
    h = jnp.dot(x, w1_ref[...], preferred_element_type=jnp.float32) + b1_ref[...]
    h = jnp.maximum(h, 0.0)  # ReLULayer
    y = jnp.dot(h, w2_ref[...], preferred_element_type=jnp.float32) + b2_ref[...]
    o_ref[...] = y.astype(o_ref.dtype)


def pad_hidden_params(w1, b1, w2, b2):
    """One-time prep (hoisted out of the forward): cast to f32 and zero-pad the
    hidden dim to the 128-lane width so the resident weight tiles and the
    intermediate activations are lane-dense. Input/output feature dims stay
    unpadded — the streamed arrays (x, y) are never padded."""
    in_dim, hid = w1.shape
    out_dim = w2.shape[1]
    hid_p = _round_up(hid, LANE)
    f32 = jnp.float32
    w1_p = jnp.zeros((in_dim, hid_p), f32).at[:, :hid].set(w1.astype(f32))
    b1_p = jnp.zeros((1, hid_p), f32).at[:, :hid].set(jnp.reshape(b1, (1, hid)).astype(f32))
    w2_p = jnp.zeros((hid_p, out_dim), f32).at[:hid, :].set(w2.astype(f32))
    b2_p = jnp.reshape(b2, (1, out_dim)).astype(f32)
    return w1_p, b1_p, w2_p, b2_p


@functools.partial(jax.jit, static_argnames=("tile_n",))
def hidden_relu_forward(x, w1, b1, w2, b2, *, tile_n=2048):
    """y = relu(x @ w1 + b1) @ w2 + b2, computed in f32 on TPU.

    x:  (N, in_dim)            w1: (in_dim, hid_p)   b1: (1, hid_p)
    w2: (hid_p, out_dim)       b2: (1, out_dim)
    (w1/b1/w2 typically pre-padded on the hidden dim via pad_hidden_params.)
    """
    n, in_dim = x.shape
    hid_p = w1.shape[1]
    out_dim = w2.shape[1]
    f32 = jnp.float32
    x = x.astype(f32)

    tn, n_p, n_blocks = _batch_tiling(n, tile_n)
    if n_p != n:
        x = jnp.pad(x, ((0, n_p - n), (0, 0)))  # zero rows; discarded below

    # ---- VMEM budget: double-buffered x/o tiles + resident params + h ------
    tile_vmem = 2 * (_vmem_footprint_bytes(tn, in_dim) + _vmem_footprint_bytes(tn, out_dim))
    param_vmem = 2 * (_vmem_footprint_bytes(in_dim, hid_p) + _vmem_footprint_bytes(1, hid_p)
                      + _vmem_footprint_bytes(hid_p, out_dim) + _vmem_footprint_bytes(1, out_dim))
    scratch_vmem = _vmem_footprint_bytes(tn, hid_p)   # intermediate activations
    vmem_need = tile_vmem + param_vmem + scratch_vmem
    if vmem_need > (48 << 20):
        raise ValueError(
            f"HiddenReLU kernel needs ~{vmem_need >> 20} MiB VMEM with fully-resident "
            "weights; shrink tile_n or add K/N grid tiling for these layer sizes.")
    vmem_limit = min(max(2 * vmem_need, 8 << 20), 48 << 20)  # headroom, <64 MiB (v7x)

    # Real (unpadded) traffic / flops so XLA schedules around the call sanely.
    cost = pl.CostEstimate(
        flops=2 * n * (in_dim * hid_p + hid_p * out_dim),
        transcendentals=0,
        bytes_accessed=4 * (n * in_dim + n * out_dim
                            + in_dim * hid_p + hid_p * out_dim + hid_p + out_dim),
    )

    out = pl.pallas_call(
        hidden_relu_kernel,
        out_shape=jax.ShapeDtypeStruct((n_p, out_dim), f32),
        grid=(n_blocks,),
        in_specs=[
            # x: streamed per batch tile (double-buffered). Last block dim ==
            # full array dim, so the narrow (unpadded) feature width is legal
            # and the HBM DMA stays contiguous.
            pl.BlockSpec((tn, in_dim), lambda i: (i, 0)),
            # Weights / biases: whole-array blocks, resident across the grid.
            pl.BlockSpec((in_dim, hid_p), lambda i: (0, 0)),
            pl.BlockSpec((1, hid_p), lambda i: (0, 0)),
            pl.BlockSpec((hid_p, out_dim), lambda i: (0, 0)),
            pl.BlockSpec((1, out_dim), lambda i: (0, 0)),
        ],
        out_specs=pl.BlockSpec((tn, out_dim), lambda i: (i, 0)),
        compiler_params=pltpu.CompilerParams(
            dimension_semantics=("parallel",),   # shard batch tiles across TCs
            vmem_limit_bytes=vmem_limit,
        ),
        cost_estimate=cost,
    )(x, w1, b1, w2, b2)

    return out[:n] if n_p != n else out


def init_linear_params(key, in_dim, out_dim):
    """Deterministic init mimicking torch.nn.Linear (uniform +/- 1/sqrt(in))."""
    k_w, k_b = jax.random.split(key)
    bound = 1.0 / jnp.sqrt(jnp.float32(in_dim))
    # Stored as (in_dim, out_dim) so the kernel does x @ W (== x @ weight.T in torch).
    w = jax.random.uniform(k_w, (in_dim, out_dim), jnp.float32, -bound, bound)
    b = jax.random.uniform(k_b, (1, out_dim), jnp.float32, -bound, bound)
    return w, b


if __name__ == "__main__":
    batch, input_dim, hidden_dim, output_dim = 8, 4, 32, 4

    key = jax.random.PRNGKey(0)
    k_x, k_l1, k_l2 = jax.random.split(key, 3)

    x = jax.random.normal(k_x, (batch, input_dim), jnp.float32)
    w1, b1 = init_linear_params(k_l1, input_dim, hidden_dim)
    w2, b2 = init_linear_params(k_l2, hidden_dim, output_dim)

    # One-time parameter prep (hoisted out of the per-call path).
    w1_p, b1_p, w2_p, b2_p = pad_hidden_params(w1, b1, w2, b2)

    # Small batch: single-block (no pipeline) path.
    out = jax.block_until_ready(hidden_relu_forward(x, w1_p, b1_p, w2_p, b2_p))
    ref = jnp.maximum(x @ w1 + b1, 0.0) @ w2 + b2
    assert out.shape == (batch, output_dim), out.shape
    assert jnp.allclose(out, ref, atol=1e-5, rtol=1e-5)

    # Larger batch with a small tile to exercise the multi-block, batch-padded
    # grid path (4 even blocks so both v7x TensorCores get work).
    k_x2 = jax.random.fold_in(k_x, 1)
    x2 = jax.random.normal(k_x2, (1000, input_dim), jnp.float32)
    out2 = jax.block_until_ready(
        hidden_relu_forward(x2, w1_p, b1_p, w2_p, b2_p, tile_n=256))
    ref2 = jnp.maximum(x2 @ w1 + b1, 0.0) @ w2 + b2
    assert out2.shape == (1000, output_dim), out2.shape
    assert jnp.allclose(out2, ref2, atol=1e-5, rtol=1e-5)

    print("KERNEL_OK")
</pallas_src>

<mosaic_0001>
module attributes {stable_mosaic.version = 11 : i64} {
  func.func @hidden_relu_kernel(%arg0: i32, %arg1: memref<8x4xf32, #tpu.memory_space<vmem>>, %arg2: memref<4x128xf32, #tpu.memory_space<vmem>>, %arg3: memref<1x128xf32, #tpu.memory_space<vmem>>, %arg4: memref<128x4xf32, #tpu.memory_space<vmem>>, %arg5: memref<1x4xf32, #tpu.memory_space<vmem>>, %arg6: memref<8x4xf32, #tpu.memory_space<vmem>>) attributes {dimension_semantics = [#tpu.dimension_semantics<parallel>], iteration_bounds = array<i64: 1>, scalar_prefetch = 0 : i64, scratch_operands = 0 : i64, tpu.core_type = #tpu.core_type<tc>, window_params = [{transform_indices = @transform_0, window_bounds = array<i64: 8, 4>}, {pipeline_mode = #tpu.pipeline_mode<synchronous>, transform_indices = @transform_1, window_bounds = array<i64: 4, 128>}, {pipeline_mode = #tpu.pipeline_mode<synchronous>, transform_indices = @transform_2, window_bounds = array<i64: 1, 128>}, {pipeline_mode = #tpu.pipeline_mode<synchronous>, transform_indices = @transform_3, window_bounds = array<i64: 128, 4>}, {pipeline_mode = #tpu.pipeline_mode<synchronous>, transform_indices = @transform_4, window_bounds = array<i64: 1, 4>}, {transform_indices = @transform_5, window_bounds = array<i64: 8, 4>}]} {
    %c0 = arith.constant 0 : index
    %c0_0 = arith.constant 0 : index
    %0 = vector.load %arg1[%c0, %c0_0] : memref<8x4xf32, #tpu.memory_space<vmem>>, vector<8x4xf32>
    %c0_1 = arith.constant 0 : index
    %c0_2 = arith.constant 0 : index
    %1 = vector.load %arg2[%c0_1, %c0_2] : memref<4x128xf32, #tpu.memory_space<vmem>>, vector<4x128xf32>
    %cst = arith.constant dense<0.000000e+00> : vector<8x128xf32>
    %2 = tpu.matmul %0, %1, %cst {dimension_numbers = #tpu.dot_dimension_numbers<[1], [0], [0], [1], [0, 0, 1, 1], [], []>} : vector<8x4xf32>, vector<4x128xf32>, vector<8x128xf32> -> vector<8x128xf32>
    %c0_3 = arith.constant 0 : index
    %c0_4 = arith.constant 0 : index
    %3 = vector.load %arg3[%c0_3, %c0_4] : memref<1x128xf32, #tpu.memory_space<vmem>>, vector<1x128xf32>
    %4 = vector.broadcast %3 : vector<1x128xf32> to vector<8x128xf32>
    %5 = arith.addf %2, %4 : vector<8x128xf32>
    %cst_5 = arith.constant 0.000000e+00 : f32
    %6 = vector.broadcast %cst_5 : f32 to vector<8x128xf32>
    %7 = arith.maximumf %5, %6 : vector<8x128xf32>
    %c0_6 = arith.constant 0 : index
    %c0_7 = arith.constant 0 : index
    %8 = vector.load %arg4[%c0_6, %c0_7] : memref<128x4xf32, #tpu.memory_space<vmem>>, vector<128x4xf32>
    %cst_8 = arith.constant dense<0.000000e+00> : vector<8x4xf32>
    %9 = tpu.matmul %7, %8, %cst_8 {dimension_numbers = #tpu.dot_dimension_numbers<[1], [0], [0], [1], [0, 0, 1, 1], [], []>} : vector<8x128xf32>, vector<128x4xf32>, vector<8x4xf32> -> vector<8x4xf32>
    %c0_9 = arith.constant 0 : index
    %c0_10 = arith.constant 0 : index
    %10 = vector.load %arg5[%c0_9, %c0_10] : memref<1x4xf32, #tpu.memory_space<vmem>>, vector<1x4xf32>
    %11 = vector.broadcast %10 : vector<1x4xf32> to vector<8x4xf32>
    %12 = arith.addf %9, %11 : vector<8x4xf32>
    %c0_11 = arith.constant 0 : index
    %c0_12 = arith.constant 0 : index
    %13 = vector.load %arg6[%c0_11, %c0_12] : memref<8x4xf32, #tpu.memory_space<vmem>>, vector<8x4xf32>
    tpu.vector_store %arg6[%c0_11, %c0_12], %12 {strides = array<i32>} : memref<8x4xf32, #tpu.memory_space<vmem>>, vector<8x4xf32>,
    return
  }
  func.func @transform_0(%arg0: i32) -> (i32, i32) {
    %c0_i32 = arith.constant 0 : i32
    %c0_i32_0 = arith.constant 0 : i32
    return %arg0, %c0_i32 : i32, i32
  }
  func.func @transform_1(%arg0: i32) -> (i32, i32) {
    %c0_i32 = arith.constant 0 : i32
    %c0_i32_0 = arith.constant 0 : i32
    %c0_i32_1 = arith.constant 0 : i32
    return %c0_i32, %c0_i32_0 : i32, i32
  }
  func.func @transform_2(%arg0: i32) -> (i32, i32) {
    %c0_i32 = arith.constant 0 : i32
    %c0_i32_0 = arith.constant 0 : i32
    %c0_i32_1 = arith.constant 0 : i32
    return %c0_i32, %c0_i32_0 : i32, i32
  }
  func.func @transform_3(%arg0: i32) -> (i32, i32) {
    %c0_i32 = arith.constant 0 : i32
    %c0_i32_0 = arith.constant 0 : i32
    %c0_i32_1 = arith.constant 0 : i32
    return %c0_i32, %c0_i32_0 : i32, i32
  }
  func.func @transform_4(%arg0: i32) -> (i32, i32) {
    %c0_i32 = arith.constant 0 : i32
    %c0_i32_0 = arith.constant 0 : i32
    %c0_i32_1 = arith.constant 0 : i32
    return %c0_i32, %c0_i32_0 : i32, i32
  }
  func.func @transform_5(%arg0: i32) -> (i32, i32) {
    %c0_i32 = arith.constant 0 : i32
    %c0_i32_0 = arith.constant 0 : i32
    return %arg0, %c0_i32 : i32, i32
  }
}

</mosaic_0001>

<llo_original>
// kernel: hidden_relu_forward.1
$region0: #{hidden_relu_forward.1}
  #allocation0 [shape = 'u32[]', space=smem, size = 0x4, offset = 0x4, fixed_abs, tag = 'smem constant byte address 0x4 - core index']
  #allocation1 [shape = 'u32[144,128]{1,0:T(1,128)}', space=vmem, size = 0x12000, scoped, tag = 'internal scratch']
  %s0 = inlined_call_operand.vmem [shape: f32[8,4], index: 0, kind: input, shape index: {}]
  %s1 = inlined_call_operand.vmem [shape: f32[4,128], index: 1, kind: input, shape index: {}]
  %s2 = inlined_call_operand.vmem [shape: f32[1,128], index: 2, kind: input, shape index: {}]
  %s3 = inlined_call_operand.vmem [shape: f32[128,4], index: 3, kind: input, shape index: {}]
  %s4 = inlined_call_operand.vmem [shape: f32[1,4], index: 4, kind: input, shape index: {}]
  %s5 = inlined_call_operand.vmem [shape: f32[8,4], index: 5, kind: output, shape index: {}]
  %s6 = sld [smem:[#allocation0]]
  $region30: #{hidden_relu_forward.1} parent=0
    _
  %s8 = ssub.s32 1, %s6
  %s9 = scalar_select 0, %s8, %s6
  // Predicated region
  $region2: #{hidden_relu_forward.1} parent=0 // pred_check
    _
  $region3: #{hidden_relu_forward.1} parent=0 // pred_check_branch
    %11 = sbr.rel (0) target = $region5
  $region4: #{hidden_relu_forward.1} parent=0 // pred_region
    _
  $region5: #{hidden_relu_forward.1} parent=0 // pred_fallthru
    _
  // Predicated region
  $region6: #{hidden_relu_forward.1} parent=0 // pred_check
    _
  $region7: #{hidden_relu_forward.1} parent=0 // pred_check_branch
    %13 = sbr.rel (0) target = $region9
  $region8: #{hidden_relu_forward.1} parent=0 // pred_region
    _
  $region9: #{hidden_relu_forward.1} parent=0 // pred_fallthru
    _
  // Predicated region
  $region10: #{hidden_relu_forward.1} parent=0 // pred_check
    _
  $region11: #{hidden_relu_forward.1} parent=0 // pred_check_branch
    %15 = sbr.rel (0) target = $region13
  $region12: #{hidden_relu_forward.1} parent=0 // pred_region
    _
  $region13: #{hidden_relu_forward.1} parent=0 // pred_fallthru
    _
  // Predicated region
  $region14: #{hidden_relu_forward.1} parent=0 // pred_check
    _
  $region15: #{hidden_relu_forward.1} parent=0 // pred_check_branch
    %17 = sbr.rel (0) target = $region17
  $region16: #{hidden_relu_forward.1} parent=0 // pred_region
    _
  $region17: #{hidden_relu_forward.1} parent=0 // pred_fallthru
    _
  // Predicated region
  $region18: #{hidden_relu_forward.1} parent=0 // pred_check
    _
  $region19: #{hidden_relu_forward.1} parent=0 // pred_check_branch
    %19 = sbr.rel (0) target = $region21
  $region20: #{hidden_relu_forward.1} parent=0 // pred_region
    _
  $region21: #{hidden_relu_forward.1} parent=0 // pred_fallthru
    _
  %v20 = vld [vmem:[%s0] sm:$0xff]
  %v21 = vld [vmem:[%s1] sm:$0xf]
  %v22 = vld [vmem:[%s2] sm:$0x1]
  %v24 = vlaneseq
  %v25 = vshrl.u32 %v24, 7
  %v26 = vsub.s32 0, %v25
  %v27 = vrot.slane %v22, %v26
  %vm29 = vcmask 31744
  %v31 = vsel %vm29, %v20, 0
  %vm33 = vcmask 1043456
  %v35 = vsel %vm33, %v21, 0
  %37 = vmatprep.subr.mxu0 0.0
  %38 = vmatpush1.msra.mxu0 %v35
  %39 = vmatprep.subr.mxu0 0.0
  %40 = vmatpush1.msra.mxu0 0.0
  %41 = vmatprep.subr.mxu0 0.0
  %42 = vmatpush1.msra.mxu0 0.0
  %43 = vmatprep.subr.mxu0 0.0
  %44 = vmatpush1.msra.mxu0 0.0
  %45 = vmatprep.subr.mxu0 0.0
  %46 = vmatpush1.msra.mxu0 0.0
  %47 = vmatprep.subr.mxu0 0.0
  %48 = vmatpush1.msra.mxu0 0.0
  %49 = vmatprep.subr.mxu0 0.0
  %50 = vmatpush1.msra.mxu0 0.0
  %51 = vmatprep.subr.mxu0 0.0
  %52 = vmatpush1.msra.mxu0 0.0
  %53 = vmatprep.subr.mxu0 0.0
  %54 = vmatpush1.msra.mxu0 0.0
  %55 = vmatprep.subr.mxu0 0.0
  %56 = vmatpush1.msra.mxu0 0.0
  %57 = vmatprep.subr.mxu0 0.0
  %58 = vmatpush1.msra.mxu0 0.0
  %59 = vmatprep.subr.mxu0 0.0
  %60 = vmatpush1.msra.mxu0 0.0
  %61 = vmatprep.subr.mxu0 0.0
  %62 = vmatpush1.msra.mxu0 0.0
  %63 = vmatprep.subr.mxu0 0.0
  %64 = vmatpush1.msra.mxu0 0.0
  %65 = vmatprep.subr.mxu0 0.0
  %66 = vmatpush1.msra.mxu0 0.0
  %67 = vmatprep.subr.mxu0 0.0
  %68 = vmatpush1.msra.mxu0 0.0
  %69 = vmatprep.subr.mxu0 0.0
  %70 = vmatpush1.msra.mxu0 0.0
  %71 = vmatprep.subr.mxu0 0.0
  %72 = vmatpush1.msra.mxu0 0.0
  %73 = vmatprep.subr.mxu0 0.0
  %74 = vmatpush1.msra.mxu0 0.0
  %75 = vmatprep.subr.mxu0 0.0
  %76 = vmatpush1.msra.mxu0 0.0
  %77 = vmatprep.subr.mxu0 0.0
  %78 = vmatpush1.msra.mxu0 0.0
  %79 = vmatprep.subr.mxu0 0.0
  %80 = vmatpush1.msra.mxu0 0.0
  %81 = vmatprep.subr.mxu0 0.0
  %82 = vmatpush1.msra.mxu0 0.0
  %83 = vmatprep.subr.mxu0 0.0
  %84 = vmatpush1.msra.mxu0 0.0
  %85 = vmatprep.subr.mxu0 0.0
  %86 = vmatpush1.msra.mxu0 0.0
  %87 = vmatprep.subr.mxu0 0.0
  %88 = vmatpush1.msra.mxu0 0.0
  %89 = vmatprep.subr.mxu0 0.0
  %90 = vmatpush1.msra.mxu0 0.0
  %91 = vmatprep.subr.mxu0 0.0
  %92 = vmatpush1.msra.mxu0 0.0
  %93 = vmatprep.subr.mxu0 0.0
  %94 = vmatpush1.msra.mxu0 0.0
  %95 = vmatprep.subr.mxu0 0.0
  %96 = vmatpush1.msra.mxu0 0.0
  %97 = vmatprep.subr.mxu0 0.0
  %98 = vmatpush1.msra.mxu0 0.0
  %99 = vmatprep.subr.mxu0 0.0
  %100 = vmatpush1.msra.mxu0 0.0
  %101 = vmatprep.mubr.f32.mxu0 0.0
  %102 = vmatmul.mubr.f32.gmra.mrb[0].mxu0 %v31
  %v103 = vpop.f32.mrb[0].mxu0
  %v104 = vadd.f32 %v27, %v103
  %v105 = vpop.f32.mrb[0].mxu0
  %106 = vdwg.mxu0
  %v107 = vmax.f32 %v104, 0.0
  %v108 = vld [vmem:[%s3] sm:$0xff]
  %v109 = vld [vmem:[%s3 + $0x8] sm:$0xff]
  %v110 = vld [vmem:[%s3 + $0x10] sm:$0xff]
  %v111 = vld [vmem:[%s3 + $0x18] sm:$0xff]
  %v112 = vld [vmem:[%s3 + $0x20] sm:$0xff]
  %v113 = vld [vmem:[%s3 + $0x28] sm:$0xff]
  %v114 = vld [vmem:[%s3 + $0x30] sm:$0xff]
  %v115 = vld [vmem:[%s3 + $0x38] sm:$0xff]
  %v116 = vld [vmem:[%s3 + $0x40] sm:$0xff]
  %v117 = vld [vmem:[%s3 + $0x48] sm:$0xff]
  %v118 = vld [vmem:[%s3 + $0x50] sm:$0xff]
  %v119 = vld [vmem:[%s3 + $0x58] sm:$0xff]
  %v120 = vld [vmem:[%s3 + $0x60] sm:$0xff]
  %v121 = vld [vmem:[%s3 + $0x68] sm:$0xff]
  %v122 = vld [vmem:[%s3 + $0x70] sm:$0xff]
  %v123 = vld [vmem:[%s3 + $0x78] sm:$0xff]
  %v124 = vld [vmem:[%s4] sm:$0x1]
  %v126 = vlaneseq
  %v127 = vshrl.u32 %v126, 7
  %v128 = vsub.s32 0, %v127
  %v129 = vrot.slane %v124, %v128
  %131 = vmatprep.subr.mxu0 0.0
  %132 = vmatpush1.msra.mxu0 %v108
  %133 = vmatprep.subr.mxu0 0.0
  %134 = vmatpush1.msra.mxu0 %v109
  %135 = vmatprep.subr.mxu0 0.0
  %136 = vmatpush1.msra.mxu0 %v110
  %137 = vmatprep.subr.mxu0 0.0
  %138 = vmatpush1.msra.mxu0 %v111
  %139 = vmatprep.subr.mxu0 0.0
  %140 = vmatpush1.msra.mxu0 %v112
  %141 = vmatprep.subr.mxu0 0.0
  %142 = vmatpush1.msra.mxu0 %v113
  %143 = vmatprep.subr.mxu0 0.0
  %144 = vmatpush1.msra.mxu0 %v114
  %145 = vmatprep.subr.mxu0 0.0
  %146 = vmatpush1.msra.mxu0 %v115
  %147 = vmatprep.subr.mxu0 0.0
  %148 = vmatpush1.msra.mxu0 %v116
  %149 = vmatprep.subr.mxu0 0.0
  %150 = vmatpush1.msra.mxu0 %v117
  %151 = vmatprep.subr.mxu0 0.0
  %152 = vmatpush1.msra.mxu0 %v118
  %153 = vmatprep.subr.mxu0 0.0
  %154 = vmatpush1.msra.mxu0 %v119
  %155 = vmatprep.subr.mxu0 0.0
  %156 = vmatpush1.msra.mxu0 %v120
  %157 = vmatprep.subr.mxu0 0.0
  %158 = vmatpush1.msra.mxu0 %v121
  %159 = vmatprep.subr.mxu0 0.0
  %160 = vmatpush1.msra.mxu0 %v122
  %161 = vmatprep.subr.mxu0 0.0
  %162 = vmatpush1.msra.mxu0 %v123
  %163 = vmatprep.subr.mxu0 0.0
  %164 = vmatpush1.msra.mxu0 0.0
  %165 = vmatprep.subr.mxu0 0.0
  %166 = vmatpush1.msra.mxu0 0.0
  %167 = vmatprep.subr.mxu0 0.0
  %168 = vmatpush1.msra.mxu0 0.0
  %169 = vmatprep.subr.mxu0 0.0
  %170 = vmatpush1.msra.mxu0 0.0
  %171 = vmatprep.subr.mxu0 0.0
  %172 = vmatpush1.msra.mxu0 0.0
  %173 = vmatprep.subr.mxu0 0.0
  %174 = vmatpush1.msra.mxu0 0.0
  %175 = vmatprep.subr.mxu0 0.0
  %176 = vmatpush1.msra.mxu0 0.0
  %177 = vmatprep.subr.mxu0 0.0
  %178 = vmatpush1.msra.mxu0 0.0
  %179 = vmatprep.subr.mxu0 0.0
  %180 = vmatpush1.msra.mxu0 0.0
  %181 = vmatprep.subr.mxu0 0.0
  %182 = vmatpush1.msra.mxu0 0.0
  %183 = vmatprep.subr.mxu0 0.0
  %184 = vmatpush1.msra.mxu0 0.0
  %185 = vmatprep.subr.mxu0 0.0
  %186 = vmatpush1.msra.mxu0 0.0
  %187 = vmatprep.subr.mxu0 0.0
  %188 = vmatpush1.msra.mxu0 0.0
  %189 = vmatprep.subr.mxu0 0.0
  %190 = vmatpush1.msra.mxu0 0.0
  %191 = vmatprep.subr.mxu0 0.0
  %192 = vmatpush1.msra.mxu0 0.0
  %193 = vmatprep.subr.mxu0 0.0
  %194 = vmatpush1.msra.mxu0 0.0
  %195 = vmatprep.mubr.f32.mxu0 0.0
  %196 = vmatmul.mubr.f32.gmra.mrb[0].mxu0 %v107
  %v197 = vpop.f32.mrb[0].mxu0
  %v198 = vadd.f32 %v129, %v197
  %v199 = vpop.f32.mrb[0].mxu0
  %200 = vdwg.mxu0
  %201 = vst.msk [vmem:[%s5] sm:$0xff] %vm29, %v198
  // Predicated region
  $region22: #{hidden_relu_forward.1} parent=0 // pred_check
    _
  $region23: #{hidden_relu_forward.1} parent=0 // pred_check_branch
    %203 = sbr.rel (0) target = $region25
  $region24: #{hidden_relu_forward.1} parent=0 // pred_region
    _
  $region25: #{hidden_relu_forward.1} parent=0 // pred_fallthru
    _
  // Predicated region
  $region26: #{hidden_relu_forward.1} parent=0 // pred_check
    _
  $region27: #{hidden_relu_forward.1} parent=0 // pred_check_branch
    %205 = sbr.rel (0) target = $region29
  $region28: #{hidden_relu_forward.1} parent=0 // pred_region
    _
  $region29: #{hidden_relu_forward.1} parent=0 // pred_fallthru
    _

</llo_original>
